<compile_context>
chip_gen: v7x
topology: tpu7x:2x2x1
jax: 0.10.0
libtpu: 0.0.40
codegen_flags: <defaults>
</compile_context>

<pallas_src>
import functools

import jax
import jax.numpy as jnp
from jax.experimental import pallas as pl
from jax.experimental.pallas import tpu as pltpu

_SUBLANE = 8


def _round_up(x, m):
    return (x + m - 1) // m * m


def _mlp_kernel(x_ref, w1_ref, b1_ref, w2_ref, b2_ref, o_ref, *,
                compute_dtype, precision):
    # Cast x to the compute dtype in-kernel (no padded/cast copy in HBM).
    x = x_ref[...].astype(compute_dtype)
    # Layer 1: Linear (MXU, f32 accumulate) + bias + ReLU (VPU, f32).
    h = jnp.dot(x, w1_ref[...],
                preferred_element_type=jnp.float32, precision=precision)
    h = jnp.maximum(h + b1_ref[...], 0.0)                 # (TB, H) + (1, H)
    # Layer 2: Linear (MXU, f32 accumulate) + bias.
    out = jnp.dot(h.astype(w2_ref.dtype), w2_ref[...],
                  preferred_element_type=jnp.float32, precision=precision)
    o_ref[...] = (out + b2_ref[...]).astype(o_ref.dtype)  # true-width store


def simple_regression_pallas(x, w1, b1, w2, b2, *, block_b=1024, use_bf16=True):
    """Forward pass of SimpleRegression.

    x : (B, n_input)
    w1: (n_input, n_hidden)   b1: (n_hidden,)      (PyTorch layer1 weight^T / bias)
    w2: (n_hidden, n_output)  b2: (n_output,)      (PyTorch layer2 weight^T / bias)
    Returns (B, n_output) in x.dtype (f32 accumulation, cast at the boundary).
    """
    B, n_input = x.shape
    n_hidden = w1.shape[1]
    n_output = w2.shape[1]

    # Batch tile: multiple of 8 sublanes, capped so tiny batches stay one tile.
    TB = min(_round_up(block_b, _SUBLANE), _round_up(B, _SUBLANE))
    grid = (pl.cdiv(B, TB),)   # ragged last block handled by Pallas write-masking

    compute_dtype = jnp.bfloat16 if use_bf16 else jnp.float32
    precision = None if use_bf16 else jax.lax.Precision.HIGHEST

    # Tiny resident operands: weights in compute dtype, biases as (1, .) f32 rows.
    w1c = w1.astype(compute_dtype)
    w2c = w2.astype(compute_dtype)
    b1c = b1.astype(jnp.float32).reshape(1, n_hidden)
    b2c = b2.astype(jnp.float32).reshape(1, n_output)

    kernel = functools.partial(_mlp_kernel,
                               compute_dtype=compute_dtype,
                               precision=precision)

    return pl.pallas_call(
        kernel,
        out_shape=jax.ShapeDtypeStruct((B, n_output), x.dtype),
        grid=grid,
        in_specs=[
            # x streams with the grid; last dim == full array dim (no lane pad).
            pl.BlockSpec((TB, n_input), lambda i: (i, 0)),
            # Weights/biases: constant index maps -> VMEM-resident across steps.
            pl.BlockSpec((n_input, n_hidden), lambda i: (0, 0)),
            pl.BlockSpec((1, n_hidden), lambda i: (0, 0)),
            pl.BlockSpec((n_hidden, n_output), lambda i: (0, 0)),
            pl.BlockSpec((1, n_output), lambda i: (0, 0)),
        ],
        # True-width output block (full last dim); no padded slab, no post-slice.
        out_specs=pl.BlockSpec((TB, n_output), lambda i: (i, 0)),
        compiler_params=pltpu.CompilerParams(
            dimension_semantics=("parallel",),   # megacore split on v7x
        ),
    )(x, w1c, b1c, w2c, b2c)


def _reference(x, w1, b1, w2, b2):
    h = jnp.maximum(x @ w1 + b1, 0.0)
    return h @ w2 + b2


if __name__ == "__main__":
    # Small, forward-implied shapes: x is (batch, n_input).
    B, n_input, n_hidden, n_output = 8, 32, 64, 8

    key = jax.random.PRNGKey(0)
    kx, kw1, kb1, kw2, kb2 = jax.random.split(key, 5)

    x = jax.random.normal(kx, (B, n_input), dtype=jnp.float32)
    w1 = jax.random.normal(kw1, (n_input, n_hidden), dtype=jnp.float32) * 0.1
    b1 = jax.random.normal(kb1, (n_hidden,), dtype=jnp.float32) * 0.1
    w2 = jax.random.normal(kw2, (n_hidden, n_output), dtype=jnp.float32) * 0.1
    b2 = jax.random.normal(kb2, (n_output,), dtype=jnp.float32) * 0.1

    ref = _reference(x, w1, b1, w2, b2)

    # f32 path (precision=HIGHEST): tight check of kernel semantics.
    out_f32 = jax.block_until_ready(
        simple_regression_pallas(x, w1, b1, w2, b2, use_bf16=False))
    assert out_f32.shape == (B, n_output)
    assert jnp.allclose(out_f32, ref, atol=1e-5, rtol=1e-5)

    # bf16 fast path (default production path): loose tolerance vs f32 reference.
    out_bf16 = jax.block_until_ready(
        simple_regression_pallas(x, w1, b1, w2, b2, use_bf16=True))
    assert out_bf16.shape == (B, n_output)
    assert jnp.allclose(out_bf16, ref, atol=5e-2, rtol=5e-2)

    print("KERNEL_OK")
</pallas_src>

<mosaic_0001>
module attributes {stable_mosaic.version = 11 : i64} {
  func.func @_mlp_kernel(%arg0: i32, %arg1: memref<8x32xf32, #tpu.memory_space<vmem>>, %arg2: memref<32x64xf32, #tpu.memory_space<vmem>>, %arg3: memref<1x64xf32, #tpu.memory_space<vmem>>, %arg4: memref<64x8xf32, #tpu.memory_space<vmem>>, %arg5: memref<1x8xf32, #tpu.memory_space<vmem>>, %arg6: memref<8x8xf32, #tpu.memory_space<vmem>>) attributes {dimension_semantics = [#tpu.dimension_semantics<parallel>], iteration_bounds = array<i64: 1>, scalar_prefetch = 0 : i64, scratch_operands = 0 : i64, tpu.core_type = #tpu.core_type<tc>, window_params = [{transform_indices = @transform_0, window_bounds = array<i64: 8, 32>}, {pipeline_mode = #tpu.pipeline_mode<synchronous>, transform_indices = @transform_1, window_bounds = array<i64: 32, 64>}, {pipeline_mode = #tpu.pipeline_mode<synchronous>, transform_indices = @transform_2, window_bounds = array<i64: 1, 64>}, {pipeline_mode = #tpu.pipeline_mode<synchronous>, transform_indices = @transform_3, window_bounds = array<i64: 64, 8>}, {pipeline_mode = #tpu.pipeline_mode<synchronous>, transform_indices = @transform_4, window_bounds = array<i64: 1, 8>}, {transform_indices = @transform_5, window_bounds = array<i64: 8, 8>}]} {
    %c0 = arith.constant 0 : index
    %c0_0 = arith.constant 0 : index
    %0 = vector.load %arg1[%c0, %c0_0] : memref<8x32xf32, #tpu.memory_space<vmem>>, vector<8x32xf32>
    %c0_1 = arith.constant 0 : index
    %c0_2 = arith.constant 0 : index
    %1 = vector.load %arg2[%c0_1, %c0_2] : memref<32x64xf32, #tpu.memory_space<vmem>>, vector<32x64xf32>
    %cst = arith.constant dense<0.000000e+00> : vector<8x64xf32>
    %2 = tpu.matmul %0, %1, %cst {dimension_numbers = #tpu.dot_dimension_numbers<[1], [0], [0], [1], [0, 0, 1, 1], [], []>, precision = #tpu.contract_precision<fp32>} : vector<8x32xf32>, vector<32x64xf32>, vector<8x64xf32> -> vector<8x64xf32>
    %c0_3 = arith.constant 0 : index
    %c0_4 = arith.constant 0 : index
    %3 = vector.load %arg3[%c0_3, %c0_4] : memref<1x64xf32, #tpu.memory_space<vmem>>, vector<1x64xf32>
    %4 = vector.broadcast %3 : vector<1x64xf32> to vector<8x64xf32>
    %5 = arith.addf %2, %4 : vector<8x64xf32>
    %cst_5 = arith.constant 0.000000e+00 : f32
    %6 = vector.broadcast %cst_5 : f32 to vector<8x64xf32>
    %7 = arith.maximumf %5, %6 : vector<8x64xf32>
    %c0_6 = arith.constant 0 : index
    %c0_7 = arith.constant 0 : index
    %8 = vector.load %arg4[%c0_6, %c0_7] : memref<64x8xf32, #tpu.memory_space<vmem>>, vector<64x8xf32>
    %cst_8 = arith.constant dense<0.000000e+00> : vector<8x8xf32>
    %9 = tpu.matmul %7, %8, %cst_8 {dimension_numbers = #tpu.dot_dimension_numbers<[1], [0], [0], [1], [0, 0, 1, 1], [], []>, precision = #tpu.contract_precision<fp32>} : vector<8x64xf32>, vector<64x8xf32>, vector<8x8xf32> -> vector<8x8xf32>
    %c0_9 = arith.constant 0 : index
    %c0_10 = arith.constant 0 : index
    %10 = vector.load %arg5[%c0_9, %c0_10] : memref<1x8xf32, #tpu.memory_space<vmem>>, vector<1x8xf32>
    %11 = vector.broadcast %10 : vector<1x8xf32> to vector<8x8xf32>
    %12 = arith.addf %9, %11 : vector<8x8xf32>
    %c0_11 = arith.constant 0 : index
    %c0_12 = arith.constant 0 : index
    %13 = vector.load %arg6[%c0_11, %c0_12] : memref<8x8xf32, #tpu.memory_space<vmem>>, vector<8x8xf32>
    tpu.vector_store %arg6[%c0_11, %c0_12], %12 {strides = array<i32>} : memref<8x8xf32, #tpu.memory_space<vmem>>, vector<8x8xf32>,
    return
  }
  func.func @transform_0(%arg0: i32) -> (i32, i32) {
    %c0_i32 = arith.constant 0 : i32
    %c0_i32_0 = arith.constant 0 : i32
    return %arg0, %c0_i32 : i32, i32
  }
  func.func @transform_1(%arg0: i32) -> (i32, i32) {
    %c0_i32 = arith.constant 0 : i32
    %c0_i32_0 = arith.constant 0 : i32
    %c0_i32_1 = arith.constant 0 : i32
    return %c0_i32, %c0_i32_0 : i32, i32
  }
  func.func @transform_2(%arg0: i32) -> (i32, i32) {
    %c0_i32 = arith.constant 0 : i32
    %c0_i32_0 = arith.constant 0 : i32
    %c0_i32_1 = arith.constant 0 : i32
    return %c0_i32, %c0_i32_0 : i32, i32
  }
  func.func @transform_3(%arg0: i32) -> (i32, i32) {
    %c0_i32 = arith.constant 0 : i32
    %c0_i32_0 = arith.constant 0 : i32
    %c0_i32_1 = arith.constant 0 : i32
    return %c0_i32, %c0_i32_0 : i32, i32
  }
  func.func @transform_4(%arg0: i32) -> (i32, i32) {
    %c0_i32 = arith.constant 0 : i32
    %c0_i32_0 = arith.constant 0 : i32
    %c0_i32_1 = arith.constant 0 : i32
    return %c0_i32, %c0_i32_0 : i32, i32
  }
  func.func @transform_5(%arg0: i32) -> (i32, i32) {
    %c0_i32 = arith.constant 0 : i32
    %c0_i32_0 = arith.constant 0 : i32
    return %arg0, %c0_i32 : i32, i32
  }
}

</mosaic_0001>

<llo_original>
// kernel: tpu_custom_call.1
$region0: #{tpu_custom_call.1}
  #allocation0 [shape = 'u32[]', space=smem, size = 0x4, offset = 0x4, fixed_abs, tag = 'smem constant byte address 0x4 - core index']
  #allocation1 [shape = 'u32[144,128]{1,0:T(1,128)}', space=vmem, size = 0x12000, scoped, tag = 'internal scratch']
  %s0 = inlined_call_operand.vmem [shape: f32[8,32], index: 0, kind: input, shape index: {}]
  %s1 = inlined_call_operand.vmem [shape: f32[32,64], index: 1, kind: input, shape index: {}]
  %s2 = inlined_call_operand.vmem [shape: f32[1,64], index: 2, kind: input, shape index: {}]
  %s3 = inlined_call_operand.vmem [shape: f32[64,8], index: 3, kind: input, shape index: {}]
  %s4 = inlined_call_operand.vmem [shape: f32[1,8], index: 4, kind: input, shape index: {}]
  %s5 = inlined_call_operand.hbm [shape: f32[8,8], index: 5, kind: output, shape index: {}]
  %s6 = sld [smem:[#allocation0]]
  $region30: #{tpu_custom_call.1} parent=0
    _
  %s8 = ssub.s32 1, %s6
  %s9 = scalar_select 0, %s8, %s6
  $region1: #{tpu_custom_call.1} parent=0
    #allocation2 [shape = 'u8[4096]{0}', space=vmem, size = 0x1000, scoped, tag = 'output window, operand 0, single buffered']
    #allocation3 [shape = 's32[1]{0}', space=sflag, size = 0x4, scoped, tag = 'scoped memory for tpu_custom_call.1']
    %10 = vsyncpa [#allocation3], 0
    // Predicated region
    $region2: #{tpu_custom_call.1} parent=1 // pred_check
      _
    $region3: #{tpu_custom_call.1} parent=1 // pred_check_branch
      %12 = sbr.rel (0) target = $region5
    $region4: #{tpu_custom_call.1} parent=1 // pred_region
      _
    $region5: #{tpu_custom_call.1} parent=1 // pred_fallthru
      _
    // Predicated region
    $region6: #{tpu_custom_call.1} parent=1 // pred_check
      _
    $region7: #{tpu_custom_call.1} parent=1 // pred_check_branch
      %14 = sbr.rel (0) target = $region9
    $region8: #{tpu_custom_call.1} parent=1 // pred_region
      _
    $region9: #{tpu_custom_call.1} parent=1 // pred_fallthru
      _
    // Predicated region
    $region10: #{tpu_custom_call.1} parent=1 // pred_check
      _
    $region11: #{tpu_custom_call.1} parent=1 // pred_check_branch
      %16 = sbr.rel (0) target = $region13
    $region12: #{tpu_custom_call.1} parent=1 // pred_region
      _
    $region13: #{tpu_custom_call.1} parent=1 // pred_fallthru
      _
    // Predicated region
    $region14: #{tpu_custom_call.1} parent=1 // pred_check
      _
    $region15: #{tpu_custom_call.1} parent=1 // pred_check_branch
      %18 = sbr.rel (0) target = $region17
    $region16: #{tpu_custom_call.1} parent=1 // pred_region
      _
    $region17: #{tpu_custom_call.1} parent=1 // pred_fallthru
      _
    // Predicated region
    $region18: #{tpu_custom_call.1} parent=1 // pred_check
      _
    $region19: #{tpu_custom_call.1} parent=1 // pred_check_branch
      %20 = sbr.rel (0) target = $region21
    $region20: #{tpu_custom_call.1} parent=1 // pred_region
      _
    $region21: #{tpu_custom_call.1} parent=1 // pred_fallthru
      _
    %v21 = vld [vmem:[%s0] sm:$0xff]
    %v22 = vld [vmem:[%s1] sm:$0xff]
    %v23 = vld [vmem:[%s1 + $0x8] sm:$0xff]
    %v24 = vld [vmem:[%s1 + $0x10] sm:$0xff]
    %v25 = vld [vmem:[%s1 + $0x18] sm:$0xff]
    %v26 = vld [vmem:[%s2] sm:$0x1]
    %v28 = vlaneseq
    %v29 = vshrl.u32 %v28, 7
    %v30 = vsub.s32 0, %v29
    %v31 = vrot.slane %v26, %v30
    %vm33 = vcmask 261120
    %v35 = vsel %vm33, %v21, 0
    %37 = vmatprep.subr.mxu0 0.0
    %v38 = vand.u32 %v22, 4294901760
    %39 = vmatpush1.msra.mxu0 %v38
    %40 = vmatprep.subr.mxu0 0.0
    %v41 = vand.u32 %v23, 4294901760
    %42 = vmatpush1.msra.mxu0 %v41
    %43 = vmatprep.subr.mxu0 0.0
    %v44 = vand.u32 %v24, 4294901760
    %45 = vmatpush1.msra.mxu0 %v44
    %46 = vmatprep.subr.mxu0 0.0
    %v47 = vand.u32 %v25, 4294901760
    %48 = vmatpush1.msra.mxu0 %v47
    %49 = vmatprep.subr.mxu0 0.0
    %50 = vmatpush1.msra.mxu0 0.0
    %51 = vmatprep.subr.mxu0 0.0
    %52 = vmatpush1.msra.mxu0 0.0
    %53 = vmatprep.subr.mxu0 0.0
    %54 = vmatpush1.msra.mxu0 0.0
    %55 = vmatprep.subr.mxu0 0.0
    %56 = vmatpush1.msra.mxu0 0.0
    %57 = vmatprep.subr.mxu0 0.0
    %58 = vmatpush1.msra.mxu0 0.0
    %59 = vmatprep.subr.mxu0 0.0
    %60 = vmatpush1.msra.mxu0 0.0
    %61 = vmatprep.subr.mxu0 0.0
    %62 = vmatpush1.msra.mxu0 0.0
    %63 = vmatprep.subr.mxu0 0.0
    %64 = vmatpush1.msra.mxu0 0.0
    %65 = vmatprep.subr.mxu0 0.0
    %66 = vmatpush1.msra.mxu0 0.0
    %67 = vmatprep.subr.mxu0 0.0
    %68 = vmatpush1.msra.mxu0 0.0
    %69 = vmatprep.subr.mxu0 0.0
    %70 = vmatpush1.msra.mxu0 0.0
    %71 = vmatprep.subr.mxu0 0.0
    %72 = vmatpush1.msra.mxu0 0.0
    %73 = vmatprep.subr.mxu0 0.0
    %74 = vmatpush1.msra.mxu0 0.0
    %75 = vmatprep.subr.mxu0 0.0
    %76 = vmatpush1.msra.mxu0 0.0
    %77 = vmatprep.subr.mxu0 0.0
    %78 = vmatpush1.msra.mxu0 0.0
    %79 = vmatprep.subr.mxu0 0.0
    %80 = vmatpush1.msra.mxu0 0.0
    %81 = vmatprep.subr.mxu0 0.0
    %82 = vmatpush1.msra.mxu0 0.0
    %83 = vmatprep.subr.mxu0 0.0
    %84 = vmatpush1.msra.mxu0 0.0
    %85 = vmatprep.subr.mxu0 0.0
    %86 = vmatpush1.msra.mxu0 0.0
    %87 = vmatprep.subr.mxu0 0.0
    %88 = vmatpush1.msra.mxu0 0.0
    %89 = vmatprep.subr.mxu0 0.0
    %90 = vmatpush1.msra.mxu0 0.0
    %91 = vmatprep.subr.mxu0 0.0
    %92 = vmatpush1.msra.mxu0 0.0
    %93 = vmatprep.subr.mxu0 0.0
    %94 = vmatpush1.msra.mxu0 0.0
    %95 = vmatprep.subr.mxu0 0.0
    %96 = vmatpush1.msra.mxu0 0.0
    %97 = vmatprep.subr.mxu0 0.0
    %98 = vmatpush1.msra.mxu0 0.0
    %99 = vmatprep.subr.mxu0 0.0
    %100 = vmatpush1.msra.mxu0 0.0
    %101 = vmatprep.subr.mxu0 0.0
    %102 = vmatpush1.msra.mxu0 0.0
    %103 = vmatprep.subr.mxu0 0.0
    %104 = vmatpush1.msra.mxu0 0.0
    %105 = vmatprep.mubr.f32.mxu0 0.0
    %v106 = vand.u32 %v35, 4294901760
    %v107 = vsub.f32 %v35, %v106
    %v108 = vand.u32 %v107, 4294901760
    %v109 = vsub.f32 %v107, %v108
    %v110 = vand.u32 %v109, 4294901760
    %111 = vmatmul.mubr.f32.gmra.mrb[0].mxu0 %v110
    %v112 = vpop.f32.mrb[0].mxu0
    %v113 = vadd.f32 %v31, %v112
    %v114 = vpop.f32.mrb[0].mxu0
    %115 = vdwg.mxu0
    %116 = vmatprep.subr.mxu0 0.0
    %v117 = vand.u32 %v22, 4294901760
    %v118 = vsub.f32 %v22, %v117
    %v119 = vand.u32 %v118, 4294901760
    %v120 = vsub.f32 %v118, %v119
    %v121 = vand.u32 %v120, 4294901760
    %122 = vmatpush1.msra.mxu0 %v121
    %123 = vmatprep.subr.mxu0 0.0
    %v124 = vand.u32 %v23, 4294901760
    %v125 = vsub.f32 %v23, %v124
    %v126 = vand.u32 %v125, 4294901760
    %v127 = vsub.f32 %v125, %v126
    %v128 = vand.u32 %v127, 4294901760
    %129 = vmatpush1.msra.mxu0 %v128
    %130 = vmatprep.subr.mxu0 0.0
    %v131 = vand.u32 %v24, 4294901760
    %v132 = vsub.f32 %v24, %v131
    %v133 = vand.u32 %v132, 4294901760
    %v134 = vsub.f32 %v132, %v133
    %v135 = vand.u32 %v134, 4294901760
    %136 = vmatpush1.msra.mxu0 %v135
    %137 = vmatprep.subr.mxu0 0.0
    %v138 = vand.u32 %v25, 4294901760
    %v139 = vsub.f32 %v25, %v138
    %v140 = vand.u32 %v139, 4294901760
    %v141 = vsub.f32 %v139, %v140
    %v142 = vand.u32 %v141, 4294901760
    %143 = vmatpush1.msra.mxu0 %v142
    %144 = vmatprep.subr.mxu0 0.0
    %145 = vmatpush1.msra.mxu0 0.0
    %146 = vmatprep.subr.mxu0 0.0
    %147 = vmatpush1.msra.mxu0 0.0
    %148 = vmatprep.subr.mxu0 0.0
    %149 = vmatpush1.msra.mxu0 0.0
    %150 = vmatprep.subr.mxu0 0.0
    %151 = vmatpush1.msra.mxu0 0.0
    %152 = vmatprep.subr.mxu0 0.0
    %153 = vmatpush1.msra.mxu0 0.0
    %154 = vmatprep.subr.mxu0 0.0
    %155 = vmatpush1.msra.mxu0 0.0
    %156 = vmatprep.subr.mxu0 0.0
    %157 = vmatpush1.msra.mxu0 0.0
    %158 = vmatprep.subr.mxu0 0.0
    %159 = vmatpush1.msra.mxu0 0.0
    %160 = vmatprep.subr.mxu0 0.0
    %161 = vmatpush1.msra.mxu0 0.0
    %162 = vmatprep.subr.mxu0 0.0
    %163 = vmatpush1.msra.mxu0 0.0
    %164 = vmatprep.subr.mxu0 0.0
    %165 = vmatpush1.msra.mxu0 0.0
    %166 = vmatprep.subr.mxu0 0.0
    %167 = vmatpush1.msra.mxu0 0.0
    %168 = vmatprep.subr.mxu0 0.0
    %169 = vmatpush1.msra.mxu0 0.0
    %170 = vmatprep.subr.mxu0 0.0
    %171 = vmatpush1.msra.mxu0 0.0
    %172 = vmatprep.subr.mxu0 0.0
    %173 = vmatpush1.msra.mxu0 0.0
    %174 = vmatprep.subr.mxu0 0.0
    %175 = vmatpush1.msra.mxu0 0.0
    %176 = vmatprep.subr.mxu0 0.0
    %177 = vmatpush1.msra.mxu0 0.0
    %178 = vmatprep.subr.mxu0 0.0
    %179 = vmatpush1.msra.mxu0 0.0
    %180 = vmatprep.subr.mxu0 0.0
    %181 = vmatpush1.msra.mxu0 0.0
    %182 = vmatprep.subr.mxu0 0.0
    %183 = vmatpush1.msra.mxu0 0.0
    %184 = vmatprep.subr.mxu0 0.0
    %185 = vmatpush1.msra.mxu0 0.0
    %186 = vmatprep.subr.mxu0 0.0
    %187 = vmatpush1.msra.mxu0 0.0
    %188 = vmatprep.subr.mxu0 0.0
    %189 = vmatpush1.msra.mxu0 0.0
    %190 = vmatprep.subr.mxu0 0.0
    %191 = vmatpush1.msra.mxu0 0.0
    %192 = vmatprep.subr.mxu0 0.0
    %193 = vmatpush1.msra.mxu0 0.0
    %194 = vmatprep.subr.mxu0 0.0
    %195 = vmatpush1.msra.mxu0 0.0
    %196 = vmatprep.subr.mxu0 0.0
    %197 = vmatpush1.msra.mxu0 0.0
    %198 = vmatprep.subr.mxu0 0.0
    %199 = vmatpush1.msra.mxu0 0.0
    %200 = vmatprep.mubr.f32.mxu0 0.0
    %v201 = vand.u32 %v35, 4294901760
    %202 = vmatmul.mubr.f32.gmra.mrb[0].mxu0 %v201
    %v203 = vpop.f32.mrb[0].mxu0
    %v204 = vadd.f32 %v113, %v203
    %v205 = vpop.f32.mrb[0].mxu0
    %206 = vdwg.mxu0
    %207 = vmatprep.subr.mxu0 0.0
    %v208 = vand.u32 %v22, 4294901760
    %v209 = vsub.f32 %v22, %v208
    %210 = vmatpush1.msra.mxu0 %v209
    %211 = vmatprep.subr.mxu0 0.0
    %v212 = vand.u32 %v23, 4294901760
    %v213 = vsub.f32 %v23, %v212
    %214 = vmatpush1.msra.mxu0 %v213
    %215 = vmatprep.subr.mxu0 0.0
    %v216 = vand.u32 %v24, 4294901760
    %v217 = vsub.f32 %v24, %v216
    %218 = vmatpush1.msra.mxu0 %v217
    %219 = vmatprep.subr.mxu0 0.0
    %v220 = vand.u32 %v25, 4294901760
    %v221 = vsub.f32 %v25, %v220
    %222 = vmatpush1.msra.mxu0 %v221
    %223 = vmatprep.subr.mxu0 0.0
    %224 = vmatpush1.msra.mxu0 0.0
    %225 = vmatprep.subr.mxu0 0.0
    %226 = vmatpush1.msra.mxu0 0.0
    %227 = vmatprep.subr.mxu0 0.0
    %228 = vmatpush1.msra.mxu0 0.0
    %229 = vmatprep.subr.mxu0 0.0
    %230 = vmatpush1.msra.mxu0 0.0
    %231 = vmatprep.subr.mxu0 0.0
    %232 = vmatpush1.msra.mxu0 0.0
    %233 = vmatprep.subr.mxu0 0.0
    %234 = vmatpush1.msra.mxu0 0.0
    %235 = vmatprep.subr.mxu0 0.0
    %236 = vmatpush1.msra.mxu0 0.0
    %237 = vmatprep.subr.mxu0 0.0
    %238 = vmatpush1.msra.mxu0 0.0
    %239 = vmatprep.subr.mxu0 0.0
    %240 = vmatpush1.msra.mxu0 0.0
    %241 = vmatprep.subr.mxu0 0.0
    %242 = vmatpush1.msra.mxu0 0.0
    %243 = vmatprep.subr.mxu0 0.0
    %244 = vmatpush1.msra.mxu0 0.0
    %245 = vmatprep.subr.mxu0 0.0
    %246 = vmatpush1.msra.mxu0 0.0
    %247 = vmatprep.subr.mxu0 0.0
    %248 = vmatpush1.msra.mxu0 0.0
    %249 = vmatprep.subr.mxu0 0.0
    %250 = vmatpush1.msra.mxu0 0.0
    %251 = vmatprep.subr.mxu0 0.0
    %252 = vmatpush1.msra.mxu0 0.0
    %253 = vmatprep.subr.mxu0 0.0
    %254 = vmatpush1.msra.mxu0 0.0
    %255 = vmatprep.subr.mxu0 0.0
    %256 = vmatpush1.msra.mxu0 0.0
    %257 = vmatprep.subr.mxu0 0.0
    %258 = vmatpush1.msra.mxu0 0.0
    %259 = vmatprep.subr.mxu0 0.0
    %260 = vmatpush1.msra.mxu0 0.0
    %261 = vmatprep.subr.mxu0 0.0
    %262 = vmatpush1.msra.mxu0 0.0
    %263 = vmatprep.subr.mxu0 0.0
    %264 = vmatpush1.msra.mxu0 0.0
    %265 = vmatprep.subr.mxu0 0.0
    %266 = vmatpush1.msra.mxu0 0.0
    %267 = vmatprep.subr.mxu0 0.0
    %268 = vmatpush1.msra.mxu0 0.0
    %269 = vmatprep.subr.mxu0 0.0
    %270 = vmatpush1.msra.mxu0 0.0
    %271 = vmatprep.subr.mxu0 0.0
    %272 = vmatpush1.msra.mxu0 0.0
    %273 = vmatprep.subr.mxu0 0.0
    %274 = vmatpush1.msra.mxu0 0.0
    %275 = vmatprep.subr.mxu0 0.0
    %276 = vmatpush1.msra.mxu0 0.0
    %277 = vmatprep.subr.mxu0 0.0
    %278 = vmatpush1.msra.mxu0 0.0
    %279 = vmatprep.mubr.f32.mxu0 0.0
    %v280 = vand.u32 %v35, 4294901760
    %v281 = vsub.f32 %v35, %v280
    %282 = vmatmul.mubr.f32.gmra.mrb[0].mxu0 %v281
    %v283 = vpop.f32.mrb[0].mxu0
    %v284 = vadd.f32 %v204, %v283
    %v285 = vpop.f32.mrb[0].mxu0
    %286 = vdwg.mxu0
    %287 = vmatprep.subr.mxu0 0.0
    %v288 = vand.u32 %v22, 4294901760
    %289 = vmatpush1.msra.mxu0 %v288
    %290 = vmatprep.subr.mxu0 0.0
    %v291 = vand.u32 %v23, 4294901760
    %292 = vmatpush1.msra.mxu0 %v291
    %293 = vmatprep.subr.mxu0 0.0
    %v294 = vand.u32 %v24, 4294901760
    %295 = vmatpush1.msra.mxu0 %v294
    %296 = vmatprep.subr.mxu0 0.0
    %v297 = vand.u32 %v25, 4294901760
    %298 = vmatpush1.msra.mxu0 %v297
    %299 = vmatprep.subr.mxu0 0.0
    %300 = vmatpush1.msra.mxu0 0.0
    %301 = vmatprep.subr.mxu0 0.0
    %302 = vmatpush1.msra.mxu0 0.0
    %303 = vmatprep.subr.mxu0 0.0
    %304 = vmatpush1.msra.mxu0 0.0
    %305 = vmatprep.subr.mxu0 0.0
    %306 = vmatpush1.msra.mxu0 0.0
    %307 = vmatprep.subr.mxu0 0.0
    %308 = vmatpush1.msra.mxu0 0.0
    %309 = vmatprep.subr.mxu0 0.0
    %310 = vmatpush1.msra.mxu0 0.0
    %311 = vmatprep.subr.mxu0 0.0
    %312 = vmatpush1.msra.mxu0 0.0
    %313 = vmatprep.subr.mxu0 0.0
    %314 = vmatpush1.msra.mxu0 0.0
    %315 = vmatprep.subr.mxu0 0.0
    %316 = vmatpush1.msra.mxu0 0.0
    %317 = vmatprep.subr.mxu0 0.0
    %318 = vmatpush1.msra.mxu0 0.0
    %319 = vmatprep.subr.mxu0 0.0
    %320 = vmatpush1.msra.mxu0 0.0
    %321 = vmatprep.subr.mxu0 0.0
    %322 = vmatpush1.msra.mxu0 0.0
    %323 = vmatprep.subr.mxu0 0.0
    %324 = vmatpush1.msra.mxu0 0.0
    %325 = vmatprep.subr.mxu0 0.0
    %326 = vmatpush1.msra.mxu0 0.0
    %327 = vmatprep.subr.mxu0 0.0
    %328 = vmatpush1.msra.mxu0 0.0
    %329 = vmatprep.subr.mxu0 0.0
    %330 = vmatpush1.msra.mxu0 0.0
    %331 = vmatprep.subr.mxu0 0.0
    %332 = vmatpush1.msra.mxu0 0.0
    %333 = vmatprep.subr.mxu0 0.0
    %334 = vmatpush1.msra.mxu0 0.0
    %335 = vmatprep.subr.mxu0 0.0
    %336 = vmatpush1.msra.mxu0 0.0
    %337 = vmatprep.subr.mxu0 0.0
    %338 = vmatpush1.msra.mxu0 0.0
    %339 = vmatprep.subr.mxu0 0.0
    %340 = vmatpush1.msra.mxu0 0.0
    %341 = vmatprep.subr.mxu0 0.0
    %342 = vmatpush1.msra.mxu0 0.0
    %343 = vmatprep.subr.mxu0 0.0
    %344 = vmatpush1.msra.mxu0 0.0
    %345 = vmatprep.subr.mxu0 0.0
    %346 = vmatpush1.msra.mxu0 0.0
    %347 = vmatprep.subr.mxu0 0.0
    %348 = vmatpush1.msra.mxu0 0.0
    %349 = vmatprep.subr.mxu0 0.0
    %350 = vmatpush1.msra.mxu0 0.0
    %351 = vmatprep.subr.mxu0 0.0
    %352 = vmatpush1.msra.mxu0 0.0
    %353 = vmatprep.subr.mxu0 0.0
    %354 = vmatpush1.msra.mxu0 0.0
    %355 = vmatprep.mubr.f32.mxu0 0.0
    %v356 = vand.u32 %v35, 4294901760
    %v357 = vsub.f32 %v35, %v356
    %v358 = vand.u32 %v357, 4294901760
    %359 = vmatmul.mubr.f32.gmra.mrb[0].mxu0 %v358
    %v360 = vpop.f32.mrb[0].mxu0
    %v361 = vadd.f32 %v284, %v360
    %v362 = vpop.f32.mrb[0].mxu0
    %363 = vdwg.mxu0
    %364 = vmatprep.subr.mxu0 0.0
    %v365 = vand.u32 %v22, 4294901760
    %v366 = vsub.f32 %v22, %v365
    %v367 = vand.u32 %v366, 4294901760
    %368 = vmatpush1.msra.mxu0 %v367
    %369 = vmatprep.subr.mxu0 0.0
    %v370 = vand.u32 %v23, 4294901760
    %v371 = vsub.f32 %v23, %v370
    %v372 = vand.u32 %v371, 4294901760
    %373 = vmatpush1.msra.mxu0 %v372
    %374 = vmatprep.subr.mxu0 0.0
    %v375 = vand.u32 %v24, 4294901760
    %v376 = vsub.f32 %v24, %v375
    %v377 = vand.u32 %v376, 4294901760
    %378 = vmatpush1.msra.mxu0 %v377
    %379 = vmatprep.subr.mxu0 0.0
    %v380 = vand.u32 %v25, 4294901760
    %v381 = vsub.f32 %v25, %v380
    %v382 = vand.u32 %v381, 4294901760
    %383 = vmatpush1.msra.mxu0 %v382
    %384 = vmatprep.subr.mxu0 0.0
    %385 = vmatpush1.msra.mxu0 0.0
    %386 = vmatprep.subr.mxu0 0.0
    %387 = vmatpush1.msra.mxu0 0.0
    %388 = vmatprep.subr.mxu0 0.0
    %389 = vmatpush1.msra.mxu0 0.0
    %390 = vmatprep.subr.mxu0 0.0
    %391 = vmatpush1.msra.mxu0 0.0
    %392 = vmatprep.subr.mxu0 0.0
    %393 = vmatpush1.msra.mxu0 0.0
    %394 = vmatprep.subr.mxu0 0.0
    %395 = vmatpush1.msra.mxu0 0.0
    %396 = vmatprep.subr.mxu0 0.0
    %397 = vmatpush1.msra.mxu0 0.0
    %398 = vmatprep.subr.mxu0 0.0
    %399 = vmatpush1.msra.mxu0 0.0
    %400 = vmatprep.subr.mxu0 0.0
    %401 = vmatpush1.msra.mxu0 0.0
    %402 = vmatprep.subr.mxu0 0.0
    %403 = vmatpush1.msra.mxu0 0.0
    %404 = vmatprep.subr.mxu0 0.0
    %405 = vmatpush1.msra.mxu0 0.0
    %406 = vmatprep.subr.mxu0 0.0
    %407 = vmatpush1.msra.mxu0 0.0
    %408 = vmatprep.subr.mxu0 0.0
    %409 = vmatpush1.msra.mxu0 0.0
    %410 = vmatprep.subr.mxu0 0.0
    %411 = vmatpush1.msra.mxu0 0.0
    %412 = vmatprep.subr.mxu0 0.0
    %413 = vmatpush1.msra.mxu0 0.0
    %414 = vmatprep.subr.mxu0 0.0
    %415 = vmatpush1.msra.mxu0 0.0
    %416 = vmatprep.subr.mxu0 0.0
    %417 = vmatpush1.msra.mxu0 0.0
    %418 = vmatprep.subr.mxu0 0.0
    %419 = vmatpush1.msra.mxu0 0.0
    %420 = vmatprep.subr.mxu0 0.0
    %421 = vmatpush1.msra.mxu0 0.0
    %422 = vmatprep.subr.mxu0 0.0
    %423 = vmatpush1.msra.mxu0 0.0
    %424 = vmatprep.subr.mxu0 0.0
    %425 = vmatpush1.msra.mxu0 0.0
    %426 = vmatprep.subr.mxu0 0.0
    %427 = vmatpush1.msra.mxu0 0.0
    %428 = vmatprep.subr.mxu0 0.0
    %429 = vmatpush1.msra.mxu0 0.0
    %430 = vmatprep.subr.mxu0 0.0
    %431 = vmatpush1.msra.mxu0 0.0
    %432 = vmatprep.subr.mxu0 0.0
    %433 = vmatpush1.msra.mxu0 0.0
    %434 = vmatprep.subr.mxu0 0.0
    %435 = vmatpush1.msra.mxu0 0.0
    %436 = vmatprep.subr.mxu0 0.0
    %437 = vmatpush1.msra.mxu0 0.0
    %438 = vmatprep.subr.mxu0 0.0
    %439 = vmatpush1.msra.mxu0 0.0
    %440 = vmatprep.mubr.f32.mxu0 0.0
    %v441 = vand.u32 %v35, 4294901760
    %442 = vmatmul.mubr.f32.gmra.mrb[0].mxu0 %v441
    %v443 = vpop.f32.mrb[0].mxu0
    %v444 = vadd.f32 %v361, %v443
    %v445 = vpop.f32.mrb[0].mxu0
    %446 = vdwg.mxu0
    %447 = vmatprep.subr.mxu0 0.0
    %v448 = vand.u32 %v22, 4294901760
    %449 = vmatpush1.msra.mxu0 %v448
    %450 = vmatprep.subr.mxu0 0.0
    %v451 = vand.u32 %v23, 4294901760
    %452 = vmatpush1.msra.mxu0 %v451
    %453 = vmatprep.subr.mxu0 0.0
    %v454 = vand.u32 %v24, 4294901760
    %455 = vmatpush1.msra.mxu0 %v454
    %456 = vmatprep.subr.mxu0 0.0
    %v457 = vand.u32 %v25, 4294901760
    %458 = vmatpush1.msra.mxu0 %v457
    %459 = vmatprep.subr.mxu0 0.0
    %460 = vmatpush1.msra.mxu0 0.0
    %461 = vmatprep.subr.mxu0 0.0
    %462 = vmatpush1.msra.mxu0 0.0
    %463 = vmatprep.subr.mxu0 0.0
    %464 = vmatpush1.msra.mxu0 0.0
    %465 = vmatprep.subr.mxu0 0.0
    %466 = vmatpush1.msra.mxu0 0.0
    %467 = vmatprep.subr.mxu0 0.0
    %468 = vmatpush1.msra.mxu0 0.0
    %469 = vmatprep.subr.mxu0 0.0
    %470 = vmatpush1.msra.mxu0 0.0
    %471 = vmatprep.subr.mxu0 0.0
    %472 = vmatpush1.msra.mxu0 0.0
    %473 = vmatprep.subr.mxu0 0.0
    %474 = vmatpush1.msra.mxu0 0.0
    %475 = vmatprep.subr.mxu0 0.0
    %476 = vmatpush1.msra.mxu0 0.0
    %477 = vmatprep.subr.mxu0 0.0
    %478 = vmatpush1.msra.mxu0 0.0
    %479 = vmatprep.subr.mxu0 0.0
    %480 = vmatpush1.msra.mxu0 0.0
    %481 = vmatprep.subr.mxu0 0.0
    %482 = vmatpush1.msra.mxu0 0.0
    %483 = vmatprep.subr.mxu0 0.0
    %484 = vmatpush1.msra.mxu0 0.0
    %485 = vmatprep.subr.mxu0 0.0
    %486 = vmatpush1.msra.mxu0 0.0
    %487 = vmatprep.subr.mxu0 0.0
    %488 = vmatpush1.msra.mxu0 0.0
    %489 = vmatprep.subr.mxu0 0.0
    %490 = vmatpush1.msra.mxu0 0.0
    %491 = vmatprep.subr.mxu0 0.0
    %492 = vmatpush1.msra.mxu0 0.0
    %493 = vmatprep.subr.mxu0 0.0
    %494 = vmatpush1.msra.mxu0 0.0
    %495 = vmatprep.subr.mxu0 0.0
    %496 = vmatpush1.msra.mxu0 0.0
    %497 = vmatprep.subr.mxu0 0.0
    %498 = vmatpush1.msra.mxu0 0.0
    %499 = vmatprep.subr.mxu0 0.0
    %500 = vmatpush1.msra.mxu0 0.0
    %501 = vmatprep.subr.mxu0 0.0
    %502 = vmatpush1.msra.mxu0 0.0
    %503 = vmatprep.subr.mxu0 0.0
    %504 = vmatpush1.msra.mxu0 0.0
    %505 = vmatprep.subr.mxu0 0.0
    %506 = vmatpush1.msra.mxu0 0.0
    %507 = vmatprep.subr.mxu0 0.0
    %508 = vmatpush1.msra.mxu0 0.0
    %509 = vmatprep.subr.mxu0 0.0
    %510 = vmatpush1.msra.mxu0 0.0
    %511 = vmatprep.subr.mxu0 0.0
    %512 = vmatpush1.msra.mxu0 0.0
    %513 = vmatprep.subr.mxu0 0.0
    %514 = vmatpush1.msra.mxu0 0.0
    %515 = vmatprep.mubr.f32.mxu0 0.0
    %v516 = vand.u32 %v35, 4294901760
    %517 = vmatmul.mubr.f32.gmra.mrb[0].mxu0 %v516
    %v518 = vpop.f32.mrb[0].mxu0
    %v519 = vadd.f32 %v444, %v518
    %v520 = vpop.f32.mrb[0].mxu0
    %521 = vdwg.mxu0
    %v522 = vmax.f32 %v519, 0.0
    %v523 = vld [vmem:[%s3] sm:$0xff]
    %v524 = vld [vmem:[%s3 + $0x8] sm:$0xff]
    %v525 = vld [vmem:[%s3 + $0x10] sm:$0xff]
    %v526 = vld [vmem:[%s3 + $0x18] sm:$0xff]
    %v527 = vld [vmem:[%s3 + $0x20] sm:$0xff]
    %v528 = vld [vmem:[%s3 + $0x28] sm:$0xff]
    %v529 = vld [vmem:[%s3 + $0x30] sm:$0xff]
    %v530 = vld [vmem:[%s3 + $0x38] sm:$0xff]
    %v531 = vld [vmem:[%s4] sm:$0x1]
    %v533 = vlaneseq
    %v534 = vshrl.u32 %v533, 7
    %v535 = vsub.s32 0, %v534
    %v536 = vrot.slane %v531, %v535
    %vm538 = vcmask 523264
    %v540 = vsel %vm538, %v522, 0
    %542 = vmatprep.subr.mxu0 0.0
    %v543 = vand.u32 %v523, 4294901760
    %544 = vmatpush1.msra.mxu0 %v543
    %545 = vmatprep.subr.mxu0 0.0
    %v546 = vand.u32 %v524, 4294901760
    %547 = vmatpush1.msra.mxu0 %v546
    %548 = vmatprep.subr.mxu0 0.0
    %v549 = vand.u32 %v525, 4294901760
    %550 = vmatpush1.msra.mxu0 %v549
    %551 = vmatprep.subr.mxu0 0.0
    %v552 = vand.u32 %v526, 4294901760
    %553 = vmatpush1.msra.mxu0 %v552
    %554 = vmatprep.subr.mxu0 0.0
    %v555 = vand.u32 %v527, 4294901760
    %556 = vmatpush1.msra.mxu0 %v555
    %557 = vmatprep.subr.mxu0 0.0
    %v558 = vand.u32 %v528, 4294901760
    %559 = vmatpush1.msra.mxu0 %v558
    %560 = vmatprep.subr.mxu0 0.0
    %v561 = vand.u32 %v529, 4294901760
    %562 = vmatpush1.msra.mxu0 %v561
    %563 = vmatprep.subr.mxu0 0.0
    %v564 = vand.u32 %v530, 4294901760
    %565 = vmatpush1.msra.mxu0 %v564
    %566 = vmatprep.subr.mxu0 0.0
    %567 = vmatpush1.msra.mxu0 0.0
    %568 = vmatprep.subr.mxu0 0.0
    %569 = vmatpush1.msra.mxu0 0.0
    %570 = vmatprep.subr.mxu0 0.0
    %571 = vmatpush1.msra.mxu0 0.0
    %572 = vmatprep.subr.mxu0 0.0
    %573 = vmatpush1.msra.mxu0 0.0
    %574 = vmatprep.subr.mxu0 0.0
    %575 = vmatpush1.msra.mxu0 0.0
    %576 = vmatprep.subr.mxu0 0.0
    %577 = vmatpush1.msra.mxu0 0.0
    %578 = vmatprep.subr.mxu0 0.0
    %579 = vmatpush1.msra.mxu0 0.0
    %580 = vmatprep.subr.mxu0 0.0
    %581 = vmatpush1.msra.mxu0 0.0
    %582 = vmatprep.subr.mxu0 0.0
    %583 = vmatpush1.msra.mxu0 0.0
    %584 = vmatprep.subr.mxu0 0.0
    %585 = vmatpush1.msra.mxu0 0.0
    %586 = vmatprep.subr.mxu0 0.0
    %587 = vmatpush1.msra.mxu0 0.0
    %588 = vmatprep.subr.mxu0 0.0
    %589 = vmatpush1.msra.mxu0 0.0
    %590 = vmatprep.subr.mxu0 0.0
    %591 = vmatpush1.msra.mxu0 0.0
    %592 = vmatprep.subr.mxu0 0.0
    %593 = vmatpush1.msra.mxu0 0.0
    %594 = vmatprep.subr.mxu0 0.0
    %595 = vmatpush1.msra.mxu0 0.0
    %596 = vmatprep.subr.mxu0 0.0
    %597 = vmatpush1.msra.mxu0 0.0
    %598 = vmatprep.subr.mxu0 0.0
    %599 = vmatpush1.msra.mxu0 0.0
    %600 = vmatprep.subr.mxu0 0.0
    %601 = vmatpush1.msra.mxu0 0.0
    %602 = vmatprep.subr.mxu0 0.0
    %603 = vmatpush1.msra.mxu0 0.0
    %604 = vmatprep.subr.mxu0 0.0
    %605 = vmatpush1.msra.mxu0 0.0
    %606 = vmatprep.subr.mxu0 0.0
    %607 = vmatpush1.msra.mxu0 0.0
    %608 = vmatprep.subr.mxu0 0.0
    %609 = vmatpush1.msra.mxu0 0.0
    %610 = vmatprep.subr.mxu0 0.0
    %611 = vmatpush1.msra.mxu0 0.0
    %612 = vmatprep.subr.mxu0 0.0
    %613 = vmatpush1.msra.mxu0 0.0
    %614 = vmatprep.mubr.f32.mxu0 0.0
    %v615 = vand.u32 %v540, 4294901760
    %v616 = vsub.f32 %v540, %v615
    %v617 = vand.u32 %v616, 4294901760
    %v618 = vsub.f32 %v616, %v617
    %v619 = vand.u32 %v618, 4294901760
    %620 = vmatmul.mubr.f32.gmra.mrb[0].mxu0 %v619
    %v621 = vpop.f32.mrb[0].mxu0
    %v622 = vadd.f32 %v536, %v621
    %v623 = vpop.f32.mrb[0].mxu0
    %624 = vdwg.mxu0
    %625 = vmatprep.subr.mxu0 0.0
    %v626 = vand.u32 %v523, 4294901760
    %v627 = vsub.f32 %v523, %v626
    %v628 = vand.u32 %v627, 4294901760
    %v629 = vsub.f32 %v627, %v628
    %v630 = vand.u32 %v629, 4294901760
    %631 = vmatpush1.msra.mxu0 %v630
    %632 = vmatprep.subr.mxu0 0.0
    %v633 = vand.u32 %v524, 4294901760
    %v634 = vsub.f32 %v524, %v633
    %v635 = vand.u32 %v634, 4294901760
    %v636 = vsub.f32 %v634, %v635
    %v637 = vand.u32 %v636, 4294901760
    %638 = vmatpush1.msra.mxu0 %v637
    %639 = vmatprep.subr.mxu0 0.0
    %v640 = vand.u32 %v525, 4294901760
    %v641 = vsub.f32 %v525, %v640
    %v642 = vand.u32 %v641, 4294901760
    %v643 = vsub.f32 %v641, %v642
    %v644 = vand.u32 %v643, 4294901760
    %645 = vmatpush1.msra.mxu0 %v644
    %646 = vmatprep.subr.mxu0 0.0
    %v647 = vand.u32 %v526, 4294901760
    %v648 = vsub.f32 %v526, %v647
    %v649 = vand.u32 %v648, 4294901760
    %v650 = vsub.f32 %v648, %v649
    %v651 = vand.u32 %v650, 4294901760
    %652 = vmatpush1.msra.mxu0 %v651
    %653 = vmatprep.subr.mxu0 0.0
    %v654 = vand.u32 %v527, 4294901760
    %v655 = vsub.f32 %v527, %v654
    %v656 = vand.u32 %v655, 4294901760
    %v657 = vsub.f32 %v655, %v656
    %v658 = vand.u32 %v657, 4294901760
    %659 = vmatpush1.msra.mxu0 %v658
    %660 = vmatprep.subr.mxu0 0.0
    %v661 = vand.u32 %v528, 4294901760
    %v662 = vsub.f32 %v528, %v661
    %v663 = vand.u32 %v662, 4294901760
    %v664 = vsub.f32 %v662, %v663
    %v665 = vand.u32 %v664, 4294901760
    %666 = vmatpush1.msra.mxu0 %v665
    %667 = vmatprep.subr.mxu0 0.0
    %v668 = vand.u32 %v529, 4294901760
    %v669 = vsub.f32 %v529, %v668
    %v670 = vand.u32 %v669, 4294901760
    %v671 = vsub.f32 %v669, %v670
    %v672 = vand.u32 %v671, 4294901760
    %673 = vmatpush1.msra.mxu0 %v672
    %674 = vmatprep.subr.mxu0 0.0
    %v675 = vand.u32 %v530, 4294901760
    %v676 = vsub.f32 %v530, %v675
    %v677 = vand.u32 %v676, 4294901760
    %v678 = vsub.f32 %v676, %v677
    %v679 = vand.u32 %v678, 4294901760
    %680 = vmatpush1.msra.mxu0 %v679
    %681 = vmatprep.subr.mxu0 0.0
    %682 = vmatpush1.msra.mxu0 0.0
    %683 = vmatprep.subr.mxu0 0.0
    %684 = vmatpush1.msra.mxu0 0.0
    %685 = vmatprep.subr.mxu0 0.0
    %686 = vmatpush1.msra.mxu0 0.0
    %687 = vmatprep.subr.mxu0 0.0
    %688 = vmatpush1.msra.mxu0 0.0
    %689 = vmatprep.subr.mxu0 0.0
    %690 = vmatpush1.msra.mxu0 0.0
    %691 = vmatprep.subr.mxu0 0.0
    %692 = vmatpush1.msra.mxu0 0.0
    %693 = vmatprep.subr.mxu0 0.0
    %694 = vmatpush1.msra.mxu0 0.0
    %695 = vmatprep.subr.mxu0 0.0
    %696 = vmatpush1.msra.mxu0 0.0
    %697 = vmatprep.subr.mxu0 0.0
    %698 = vmatpush1.msra.mxu0 0.0
    %699 = vmatprep.subr.mxu0 0.0
    %700 = vmatpush1.msra.mxu0 0.0
    %701 = vmatprep.subr.mxu0 0.0
    %702 = vmatpush1.msra.mxu0 0.0
    %703 = vmatprep.subr.mxu0 0.0
    %704 = vmatpush1.msra.mxu0 0.0
    %705 = vmatprep.subr.mxu0 0.0
    %706 = vmatpush1.msra.mxu0 0.0
    %707 = vmatprep.subr.mxu0 0.0
    %708 = vmatpush1.msra.mxu0 0.0
    %709 = vmatprep.subr.mxu0 0.0
    %710 = vmatpush1.msra.mxu0 0.0
    %711 = vmatprep.subr.mxu0 0.0
    %712 = vmatpush1.msra.mxu0 0.0
    %713 = vmatprep.subr.mxu0 0.0
    %714 = vmatpush1.msra.mxu0 0.0
    %715 = vmatprep.subr.mxu0 0.0
    %716 = vmatpush1.msra.mxu0 0.0
    %717 = vmatprep.subr.mxu0 0.0
    %718 = vmatpush1.msra.mxu0 0.0
    %719 = vmatprep.subr.mxu0 0.0
    %720 = vmatpush1.msra.mxu0 0.0
    %721 = vmatprep.subr.mxu0 0.0
    %722 = vmatpush1.msra.mxu0 0.0
    %723 = vmatprep.subr.mxu0 0.0
    %724 = vmatpush1.msra.mxu0 0.0
    %725 = vmatprep.subr.mxu0 0.0
    %726 = vmatpush1.msra.mxu0 0.0
    %727 = vmatprep.subr.mxu0 0.0
    %728 = vmatpush1.msra.mxu0 0.0
    %729 = vmatprep.mubr.f32.mxu0 0.0
    %v730 = vand.u32 %v540, 4294901760
    %731 = vmatmul.mubr.f32.gmra.mrb[0].mxu0 %v730
    %v732 = vpop.f32.mrb[0].mxu0
    %v733 = vadd.f32 %v622, %v732
    %v734 = vpop.f32.mrb[0].mxu0
    %735 = vdwg.mxu0
    %736 = vmatprep.subr.mxu0 0.0
    %v737 = vand.u32 %v523, 4294901760
    %v738 = vsub.f32 %v523, %v737
    %739 = vmatpush1.msra.mxu0 %v738
    %740 = vmatprep.subr.mxu0 0.0
    %v741 = vand.u32 %v524, 4294901760
    %v742 = vsub.f32 %v524, %v741
    %743 = vmatpush1.msra.mxu0 %v742
    %744 = vmatprep.subr.mxu0 0.0
    %v745 = vand.u32 %v525, 4294901760
    %v746 = vsub.f32 %v525, %v745
    %747 = vmatpush1.msra.mxu0 %v746
    %748 = vmatprep.subr.mxu0 0.0
    %v749 = vand.u32 %v526, 4294901760
    %v750 = vsub.f32 %v526, %v749
    %751 = vmatpush1.msra.mxu0 %v750
    %752 = vmatprep.subr.mxu0 0.0
    %v753 = vand.u32 %v527, 4294901760
    %v754 = vsub.f32 %v527, %v753
    %755 = vmatpush1.msra.mxu0 %v754
    %756 = vmatprep.subr.mxu0 0.0
    %v757 = vand.u32 %v528, 4294901760
    %v758 = vsub.f32 %v528, %v757
    %759 = vmatpush1.msra.mxu0 %v758
    %760 = vmatprep.subr.mxu0 0.0
    %v761 = vand.u32 %v529, 4294901760
    %v762 = vsub.f32 %v529, %v761
    %763 = vmatpush1.msra.mxu0 %v762
    %764 = vmatprep.subr.mxu0 0.0
    %v765 = vand.u32 %v530, 4294901760
    %v766 = vsub.f32 %v530, %v765
    %767 = vmatpush1.msra.mxu0 %v766
    %768 = vmatprep.subr.mxu0 0.0
    %769 = vmatpush1.msra.mxu0 0.0
    %770 = vmatprep.subr.mxu0 0.0
    %771 = vmatpush1.msra.mxu0 0.0
    %772 = vmatprep.subr.mxu0 0.0
    %773 = vmatpush1.msra.mxu0 0.0
    %774 = vmatprep.subr.mxu0 0.0
    %775 = vmatpush1.msra.mxu0 0.0
    %776 = vmatprep.subr.mxu0 0.0
    %777 = vmatpush1.msra.mxu0 0.0
    %778 = vmatprep.subr.mxu0 0.0
    %779 = vmatpush1.msra.mxu0 0.0
    %780 = vmatprep.subr.mxu0 0.0
    %781 = vmatpush1.msra.mxu0 0.0
    %782 = vmatprep.subr.mxu0 0.0
    %783 = vmatpush1.msra.mxu0 0.0
    %784 = vmatprep.subr.mxu0 0.0
    %785 = vmatpush1.msra.mxu0 0.0
    %786 = vmatprep.subr.mxu0 0.0
    %787 = vmatpush1.msra.mxu0 0.0
    %788 = vmatprep.subr.mxu0 0.0
    %789 = vmatpush1.msra.mxu0 0.0
    %790 = vmatprep.subr.mxu0 0.0
    %791 = vmatpush1.msra.mxu0 0.0
    %792 = vmatprep.subr.mxu0 0.0
    %793 = vmatpush1.msra.mxu0 0.0
    %794 = vmatprep.subr.mxu0 0.0
    %795 = vmatpush1.msra.mxu0 0.0
    %796 = vmatprep.subr.mxu0 0.0
    %797 = vmatpush1.msra.mxu0 0.0
    %798 = vmatprep.subr.mxu0 0.0
    %799 = vmatpush1.msra.mxu0 0.0
    %800 = vmatprep.subr.mxu0 0.0
    %801 = vmatpush1.msra.mxu0 0.0
    %802 = vmatprep.subr.mxu0 0.0
    %803 = vmatpush1.msra.mxu0 0.0
    %804 = vmatprep.subr.mxu0 0.0
    %805 = vmatpush1.msra.mxu0 0.0
    %806 = vmatprep.subr.mxu0 0.0
    %807 = vmatpush1.msra.mxu0 0.0
    %808 = vmatprep.subr.mxu0 0.0
    %809 = vmatpush1.msra.mxu0 0.0
    %810 = vmatprep.subr.mxu0 0.0
    %811 = vmatpush1.msra.mxu0 0.0
    %812 = vmatprep.subr.mxu0 0.0
    %813 = vmatpush1.msra.mxu0 0.0
    %814 = vmatprep.subr.mxu0 0.0
    %815 = vmatpush1.msra.mxu0 0.0
    %816 = vmatprep.mubr.f32.mxu0 0.0
    %v817 = vand.u32 %v540, 4294901760
    %v818 = vsub.f32 %v540, %v817
    %819 = vmatmul.mubr.f32.gmra.mrb[0].mxu0 %v818
    %v820 = vpop.f32.mrb[0].mxu0
    %v821 = vadd.f32 %v733, %v820
    %v822 = vpop.f32.mrb[0].mxu0
    %823 = vdwg.mxu0
    %824 = vmatprep.subr.mxu0 0.0
    %v825 = vand.u32 %v523, 4294901760
    %826 = vmatpush1.msra.mxu0 %v825
    %827 = vmatprep.subr.mxu0 0.0
    %v828 = vand.u32 %v524, 4294901760
    %829 = vmatpush1.msra.mxu0 %v828
    %830 = vmatprep.subr.mxu0 0.0
    %v831 = vand.u32 %v525, 4294901760
    %832 = vmatpush1.msra.mxu0 %v831
    %833 = vmatprep.subr.mxu0 0.0
    %v834 = vand.u32 %v526, 4294901760
    %835 = vmatpush1.msra.mxu0 %v834
    %836 = vmatprep.subr.mxu0 0.0
    %v837 = vand.u32 %v527, 4294901760
    %838 = vmatpush1.msra.mxu0 %v837
    %839 = vmatprep.subr.mxu0 0.0
    %v840 = vand.u32 %v528, 4294901760
    %841 = vmatpush1.msra.mxu0 %v840
    %842 = vmatprep.subr.mxu0 0.0
    %v843 = vand.u32 %v529, 4294901760
    %844 = vmatpush1.msra.mxu0 %v843
    %845 = vmatprep.subr.mxu0 0.0
    %v846 = vand.u32 %v530, 4294901760
    %847 = vmatpush1.msra.mxu0 %v846
    %848 = vmatprep.subr.mxu0 0.0
    %849 = vmatpush1.msra.mxu0 0.0
    %850 = vmatprep.subr.mxu0 0.0
    %851 = vmatpush1.msra.mxu0 0.0
    %852 = vmatprep.subr.mxu0 0.0
    %853 = vmatpush1.msra.mxu0 0.0
    %854 = vmatprep.subr.mxu0 0.0
    %855 = vmatpush1.msra.mxu0 0.0
    %856 = vmatprep.subr.mxu0 0.0
    %857 = vmatpush1.msra.mxu0 0.0
    %858 = vmatprep.subr.mxu0 0.0
    %859 = vmatpush1.msra.mxu0 0.0
    %860 = vmatprep.subr.mxu0 0.0
    %861 = vmatpush1.msra.mxu0 0.0
    %862 = vmatprep.subr.mxu0 0.0
    %863 = vmatpush1.msra.mxu0 0.0
    %864 = vmatprep.subr.mxu0 0.0
    %865 = vmatpush1.msra.mxu0 0.0
    %866 = vmatprep.subr.mxu0 0.0
    %867 = vmatpush1.msra.mxu0 0.0
    %868 = vmatprep.subr.mxu0 0.0
    %869 = vmatpush1.msra.mxu0 0.0
    %870 = vmatprep.subr.mxu0 0.0
    %871 = vmatpush1.msra.mxu0 0.0
    %872 = vmatprep.subr.mxu0 0.0
    %873 = vmatpush1.msra.mxu0 0.0
    %874 = vmatprep.subr.mxu0 0.0
    %875 = vmatpush1.msra.mxu0 0.0
    %876 = vmatprep.subr.mxu0 0.0
    %877 = vmatpush1.msra.mxu0 0.0
    %878 = vmatprep.subr.mxu0 0.0
    %879 = vmatpush1.msra.mxu0 0.0
    %880 = vmatprep.subr.mxu0 0.0
    %881 = vmatpush1.msra.mxu0 0.0
    %882 = vmatprep.subr.mxu0 0.0
    %883 = vmatpush1.msra.mxu0 0.0
    %884 = vmatprep.subr.mxu0 0.0
    %885 = vmatpush1.msra.mxu0 0.0
    %886 = vmatprep.subr.mxu0 0.0
    %887 = vmatpush1.msra.mxu0 0.0
    %888 = vmatprep.subr.mxu0 0.0
    %889 = vmatpush1.msra.mxu0 0.0
    %890 = vmatprep.subr.mxu0 0.0
    %891 = vmatpush1.msra.mxu0 0.0
    %892 = vmatprep.subr.mxu0 0.0
    %893 = vmatpush1.msra.mxu0 0.0
    %894 = vmatprep.subr.mxu0 0.0
    %895 = vmatpush1.msra.mxu0 0.0
    %896 = vmatprep.mubr.f32.mxu0 0.0
    %v897 = vand.u32 %v540, 4294901760
    %v898 = vsub.f32 %v540, %v897
    %v899 = vand.u32 %v898, 4294901760
    %900 = vmatmul.mubr.f32.gmra.mrb[0].mxu0 %v899
    %v901 = vpop.f32.mrb[0].mxu0
    %v902 = vadd.f32 %v821, %v901
    %v903 = vpop.f32.mrb[0].mxu0
    %904 = vdwg.mxu0
    %905 = vmatprep.subr.mxu0 0.0
    %v906 = vand.u32 %v523, 4294901760
    %v907 = vsub.f32 %v523, %v906
    %v908 = vand.u32 %v907, 4294901760
    %909 = vmatpush1.msra.mxu0 %v908
    %910 = vmatprep.subr.mxu0 0.0
    %v911 = vand.u32 %v524, 4294901760
    %v912 = vsub.f32 %v524, %v911
    %v913 = vand.u32 %v912, 4294901760
    %914 = vmatpush1.msra.mxu0 %v913
    %915 = vmatprep.subr.mxu0 0.0
    %v916 = vand.u32 %v525, 4294901760
    %v917 = vsub.f32 %v525, %v916
    %v918 = vand.u32 %v917, 4294901760
    %919 = vmatpush1.msra.mxu0 %v918
    %920 = vmatprep.subr.mxu0 0.0
    %v921 = vand.u32 %v526, 4294901760
    %v922 = vsub.f32 %v526, %v921
    %v923 = vand.u32 %v922, 4294901760
    %924 = vmatpush1.msra.mxu0 %v923
    %925 = vmatprep.subr.mxu0 0.0
    %v926 = vand.u32 %v527, 4294901760
    %v927 = vsub.f32 %v527, %v926
    %v928 = vand.u32 %v927, 4294901760
    %929 = vmatpush1.msra.mxu0 %v928
    %930 = vmatprep.subr.mxu0 0.0
    %v931 = vand.u32 %v528, 4294901760
    %v932 = vsub.f32 %v528, %v931
    %v933 = vand.u32 %v932, 4294901760
    %934 = vmatpush1.msra.mxu0 %v933
    %935 = vmatprep.subr.mxu0 0.0
    %v936 = vand.u32 %v529, 4294901760
    %v937 = vsub.f32 %v529, %v936
    %v938 = vand.u32 %v937, 4294901760
    %939 = vmatpush1.msra.mxu0 %v938
    %940 = vmatprep.subr.mxu0 0.0
    %v941 = vand.u32 %v530, 4294901760
    %v942 = vsub.f32 %v530, %v941
    %v943 = vand.u32 %v942, 4294901760
    %944 = vmatpush1.msra.mxu0 %v943
    %945 = vmatprep.subr.mxu0 0.0
    %946 = vmatpush1.msra.mxu0 0.0
    %947 = vmatprep.subr.mxu0 0.0
    %948 = vmatpush1.msra.mxu0 0.0
    %949 = vmatprep.subr.mxu0 0.0
    %950 = vmatpush1.msra.mxu0 0.0
    %951 = vmatprep.subr.mxu0 0.0
    %952 = vmatpush1.msra.mxu0 0.0
    %953 = vmatprep.subr.mxu0 0.0
    %954 = vmatpush1.msra.mxu0 0.0
    %955 = vmatprep.subr.mxu0 0.0
    %956 = vmatpush1.msra.mxu0 0.0
    %957 = vmatprep.subr.mxu0 0.0
    %958 = vmatpush1.msra.mxu0 0.0
    %959 = vmatprep.subr.mxu0 0.0
    %960 = vmatpush1.msra.mxu0 0.0
    %961 = vmatprep.subr.mxu0 0.0
    %962 = vmatpush1.msra.mxu0 0.0
    %963 = vmatprep.subr.mxu0 0.0
    %964 = vmatpush1.msra.mxu0 0.0
    %965 = vmatprep.subr.mxu0 0.0
    %966 = vmatpush1.msra.mxu0 0.0
    %967 = vmatprep.subr.mxu0 0.0
    %968 = vmatpush1.msra.mxu0 0.0
    %969 = vmatprep.subr.mxu0 0.0
    %970 = vmatpush1.msra.mxu0 0.0
    %971 = vmatprep.subr.mxu0 0.0
    %972 = vmatpush1.msra.mxu0 0.0
    %973 = vmatprep.subr.mxu0 0.0
    %974 = vmatpush1.msra.mxu0 0.0
    %975 = vmatprep.subr.mxu0 0.0
    %976 = vmatpush1.msra.mxu0 0.0
    %977 = vmatprep.subr.mxu0 0.0
    %978 = vmatpush1.msra.mxu0 0.0
    %979 = vmatprep.subr.mxu0 0.0
    %980 = vmatpush1.msra.mxu0 0.0
    %981 = vmatprep.subr.mxu0 0.0
    %982 = vmatpush1.msra.mxu0 0.0
    %983 = vmatprep.subr.mxu0 0.0
    %984 = vmatpush1.msra.mxu0 0.0
    %985 = vmatprep.subr.mxu0 0.0
    %986 = vmatpush1.msra.mxu0 0.0
    %987 = vmatprep.subr.mxu0 0.0
    %988 = vmatpush1.msra.mxu0 0.0
    %989 = vmatprep.subr.mxu0 0.0
    %990 = vmatpush1.msra.mxu0 0.0
    %991 = vmatprep.subr.mxu0 0.0
    %992 = vmatpush1.msra.mxu0 0.0
    %993 = vmatprep.mubr.f32.mxu0 0.0
    %v994 = vand.u32 %v540, 4294901760
    %995 = vmatmul.mubr.f32.gmra.mrb[0].mxu0 %v994
    %v996 = vpop.f32.mrb[0].mxu0
    %v997 = vadd.f32 %v902, %v996
    %v998 = vpop.f32.mrb[0].mxu0
    %999 = vdwg.mxu0
    %1000 = vmatprep.subr.mxu0 0.0
    %v1001 = vand.u32 %v523, 4294901760
    %1002 = vmatpush1.msra.mxu0 %v1001
    %1003 = vmatprep.subr.mxu0 0.0
    %v1004 = vand.u32 %v524, 4294901760
    %1005 = vmatpush1.msra.mxu0 %v1004
    %1006 = vmatprep.subr.mxu0 0.0
    %v1007 = vand.u32 %v525, 4294901760
    %1008 = vmatpush1.msra.mxu0 %v1007
    %1009 = vmatprep.subr.mxu0 0.0
    %v1010 = vand.u32 %v526, 4294901760
    %1011 = vmatpush1.msra.mxu0 %v1010
    %1012 = vmatprep.subr.mxu0 0.0
    %v1013 = vand.u32 %v527, 4294901760
    %1014 = vmatpush1.msra.mxu0 %v1013
    %1015 = vmatprep.subr.mxu0 0.0
    %v1016 = vand.u32 %v528, 4294901760
    %1017 = vmatpush1.msra.mxu0 %v1016
    %1018 = vmatprep.subr.mxu0 0.0
    %v1019 = vand.u32 %v529, 4294901760
    %1020 = vmatpush1.msra.mxu0 %v1019
    %1021 = vmatprep.subr.mxu0 0.0
    %v1022 = vand.u32 %v530, 4294901760
    %1023 = vmatpush1.msra.mxu0 %v1022
    %1024 = vmatprep.subr.mxu0 0.0
    %1025 = vmatpush1.msra.mxu0 0.0
    %1026 = vmatprep.subr.mxu0 0.0
    %1027 = vmatpush1.msra.mxu0 0.0
    %1028 = vmatprep.subr.mxu0 0.0
    %1029 = vmatpush1.msra.mxu0 0.0
    %1030 = vmatprep.subr.mxu0 0.0
    %1031 = vmatpush1.msra.mxu0 0.0
    %1032 = vmatprep.subr.mxu0 0.0
    %1033 = vmatpush1.msra.mxu0 0.0
    %1034 = vmatprep.subr.mxu0 0.0
    %1035 = vmatpush1.msra.mxu0 0.0
    %1036 = vmatprep.subr.mxu0 0.0
    %1037 = vmatpush1.msra.mxu0 0.0
    %1038 = vmatprep.subr.mxu0 0.0
    %1039 = vmatpush1.msra.mxu0 0.0
    %1040 = vmatprep.subr.mxu0 0.0
    %1041 = vmatpush1.msra.mxu0 0.0
    %1042 = vmatprep.subr.mxu0 0.0
    %1043 = vmatpush1.msra.mxu0 0.0
    %1044 = vmatprep.subr.mxu0 0.0
    %1045 = vmatpush1.msra.mxu0 0.0
    %1046 = vmatprep.subr.mxu0 0.0
    %1047 = vmatpush1.msra.mxu0 0.0
    %1048 = vmatprep.subr.mxu0 0.0
    %1049 = vmatpush1.msra.mxu0 0.0
    %1050 = vmatprep.subr.mxu0 0.0
    %1051 = vmatpush1.msra.mxu0 0.0
    %1052 = vmatprep.subr.mxu0 0.0
    %1053 = vmatpush1.msra.mxu0 0.0
    %1054 = vmatprep.subr.mxu0 0.0
    %1055 = vmatpush1.msra.mxu0 0.0
    %1056 = vmatprep.subr.mxu0 0.0
    %1057 = vmatpush1.msra.mxu0 0.0
    %1058 = vmatprep.subr.mxu0 0.0
    %1059 = vmatpush1.msra.mxu0 0.0
    %1060 = vmatprep.subr.mxu0 0.0
    %1061 = vmatpush1.msra.mxu0 0.0
    %1062 = vmatprep.subr.mxu0 0.0
    %1063 = vmatpush1.msra.mxu0 0.0
    %1064 = vmatprep.subr.mxu0 0.0
    %1065 = vmatpush1.msra.mxu0 0.0
    %1066 = vmatprep.subr.mxu0 0.0
    %1067 = vmatpush1.msra.mxu0 0.0
    %1068 = vmatprep.subr.mxu0 0.0
    %1069 = vmatpush1.msra.mxu0 0.0
    %1070 = vmatprep.subr.mxu0 0.0
    %1071 = vmatpush1.msra.mxu0 0.0
    %1072 = vmatprep.mubr.f32.mxu0 0.0
    %v1073 = vand.u32 %v540, 4294901760
    %1074 = vmatmul.mubr.f32.gmra.mrb[0].mxu0 %v1073
    %v1075 = vpop.f32.mrb[0].mxu0
    %v1076 = vadd.f32 %v997, %v1075
    %v1077 = vpop.f32.mrb[0].mxu0
    %1078 = vdwg.mxu0
    %vm1079 = vcmask 64512
    %1080 = vst.msk [vmem:[#allocation2] sm:$0xff] %vm1079, %v1076
    // Predicated region
    $region22: #{tpu_custom_call.1} parent=1 // pred_check
      _
    $region23: #{tpu_custom_call.1} parent=1 // pred_check_branch
      %1082 = sbr.rel (0) target = $region25
    $region24: #{tpu_custom_call.1} parent=1 // pred_region
      %s1084 = ssub.s32 128, 128
      %1085 = vsyncadd [#allocation3], %s1084
      %s1087 = sshll.u32 [#allocation2], 4
      %s1088 = int_to_ptr.vmem [resolvable:$true] %s1087
      %1090 = dma.vmem_to_hbm [thread:$0]  %s1088, 128, %s5, [#allocation3]
    $region25: #{tpu_custom_call.1} parent=1 // pred_fallthru
      _
    // Predicated region
    $region26: #{tpu_custom_call.1} parent=1 // pred_check
      _
    $region27: #{tpu_custom_call.1} parent=1 // pred_check_branch
      %1092 = sbr.rel (0) target = $region29
    $region28: #{tpu_custom_call.1} parent=1 // pred_region
      %1093 = dma.done [#allocation3], 128
    $region29: #{tpu_custom_call.1} parent=1 // pred_fallthru
      _
    %1094 = vsyncpa [#allocation3], 1

</llo_original>
